<compile_context>
chip_gen: v7x
topology: tpu7x:2x2x1
jax: 0.10.0
libtpu: 0.0.40
codegen_flags: <defaults>
</compile_context>

<pallas_src>
import jax
import jax.numpy as jnp
from jax import lax
from jax.experimental import pallas as pl
from jax.experimental.pallas import tpu as pltpu

EPS = 1e-5               # torch.nn.GroupNorm default eps
GATE_THRESHOLD = 0.5     # SRU default gate_treshold


def _chip_budgets():
    """(block_budget_bytes, base_vmem_limit, vmem_cap, is_v5) per TPU generation."""
    try:
        kind = jax.devices()[0].device_kind.lower()
    except Exception:
        kind = ""
    if "v7" in kind:                       # 64 MiB physical VMEM per TC -> stay small
        return 4 << 20, 32 << 20, 48 << 20, False
    if "v5" in kind:                       # HBM-bound -> bigger tiles
        return 10 << 20, 64 << 20, 96 << 20, True
    if "v6" in kind:
        return 8 << 20, 64 << 20, 96 << 20, False
    return 4 << 20, 32 << 20, 48 << 20, False


def _choose_cb(half_c, cg, hwb, itemsize, budget, n_batch):
    """Channel-block size per half: multiple of the group size, sublane aligned,
    largest that fits the per-block budget, with a mild preference for >= 4 grid
    steps (megacore balance / pipeline depth) when blocks stay big enough."""
    align = 8 if itemsize >= 4 else 16            # bf16 sublane tile is 16
    per_ch = 2 * hwb * (2 * itemsize)             # "2" halves, in + out
    cands = [cb for cb in range(cg, half_c + 1, cg)
             if half_c % cb == 0 and (cb % align == 0 or cb == half_c)]
    fitting = [cb for cb in cands if cb * per_ch <= budget] or [min(cands)]
    best = max(fitting)
    if n_batch * (half_c // best) < 4:
        for cb in sorted(fitting):
            if cb * per_ch >= 256 * 1024 and n_batch * (half_c // cb) >= 4:
                return cb
    return best


def _make_sru_kernel(cg, hw, n_pad, gate_threshold, compute_dtype):
    inv_cnt = 1.0 / float(cg * hw)
    f32 = jnp.float32

    def kernel(x_ref, gm_ref, w_ref, b_ref, wg_ref, y_ref):
        # x_ref/y_ref: (1, 2, Cb, HWb); gm_ref: (Cb, Cb) f32; w/b/wg: (2, Cb, 1) f32
        gm = gm_ref[...]
        xt = x_ref[0, 0].astype(compute_dtype)           # (Cb, HWb)
        xb = x_ref[0, 1].astype(compute_dtype)

        # ---- group statistics (f32 accumulation), batched across both halves ----
        s = jnp.concatenate(
            [jnp.sum(xt, axis=1, keepdims=True, dtype=f32),
             jnp.sum(xb, axis=1, keepdims=True, dtype=f32)], axis=1)        # (Cb, 2)
        mean = jnp.dot(gm, s, preferred_element_type=f32) * inv_cnt          # (Cb, 2)
        m_t = mean[:, 0:1]
        m_b = mean[:, 1:2]
        d_t = xt - m_t.astype(compute_dtype)
        d_b = xb - m_b.astype(compute_dtype)
        v = jnp.concatenate(
            [jnp.sum(d_t * d_t, axis=1, keepdims=True, dtype=f32),
             jnp.sum(d_b * d_b, axis=1, keepdims=True, dtype=f32)], axis=1)  # (Cb, 2)
        if n_pad > 0:
            # pad lanes hold x == 0 => d == -mean there; remove their d^2 = mean^2
            v = v - float(n_pad) * (mean * mean)
        var = jnp.dot(gm, v, preferred_element_type=f32) * inv_cnt           # biased var
        inv_std = lax.rsqrt(var + EPS)                                       # (Cb, 2)

        # ---- per-half gating (elementwise, compute_dtype) ----
        def gate_half(x, d, col, w, b, wg):
            scale = (inv_std[:, col:col + 1] * w).astype(compute_dtype)      # (Cb, 1)
            gn = d * scale + b.astype(compute_dtype)
            z = gn * wg.astype(compute_dtype)
            rew = jax.nn.sigmoid(z)
            if gate_threshold == 0.5:
                gate = z > 0                       # sigmoid(z) > 0.5  <=>  z > 0
            else:
                gate = rew > jnp.asarray(gate_threshold, compute_dtype)
            t = rew * x
            x1 = jnp.where(gate, x, t)                     # w1 * x
            x2 = jnp.where(gate, jnp.zeros_like(t), t)     # w2 * x
            return x1, x2

        x1t, x2t = gate_half(xt, d_t, 0, w_ref[0], b_ref[0], wg_ref[0])
        x1b, x2b = gate_half(xb, d_b, 1, w_ref[1], b_ref[1], wg_ref[1])

        # reconstruct: top half <- x1_top + x2_bottom ; bottom half <- x1_bottom + x2_top
        y_ref[0, 0] = (x1t + x2b).astype(y_ref.dtype)
        y_ref[0, 1] = (x1b + x2t).astype(y_ref.dtype)

    return kernel


def sru_forward(x_nchw, weight, bias, group_num=16, gate_threshold=GATE_THRESHOLD):
    N, C, H, W = x_nchw.shape
    G = group_num
    assert C >= G and C % G == 0 and C % 2 == 0 and G % 2 == 0
    Cg = C // G
    half_c = C // 2
    HW = H * W

    in_dtype = x_nchw.dtype
    itemsize = jnp.dtype(in_dtype).itemsize

    budget, vmem_limit, vmem_cap, is_v5 = _chip_budgets()

    # bf16 elementwise math where the VPU is bf16-native (v6e/v7x); stats stay f32.
    if in_dtype == jnp.bfloat16 and not is_v5:
        compute_dtype = jnp.bfloat16
    else:
        compute_dtype = jnp.float32

    # Lane padding to a 128 multiple only when it is cheap (<= ~5% extra traffic);
    # otherwise keep the exact HW extent (full-extent last block dim is legal).
    HWp = ((HW + 127) // 128) * 128
    if HWp == HW or HWp * 20 <= HW * 21:
        HWb, n_pad = HWp, HWp - HW
    else:
        HWb, n_pad = HW, 0

    # (N,C,H,W) -> (N, 2, C//2, HW): contiguous reshape, keeps native dtype.
    xk = x_nchw.reshape(N, 2, half_c, HW)
    if n_pad:
        xk = jnp.pad(xk, ((0, 0), (0, 0), (0, 0), (0, n_pad)))

    w = weight.astype(jnp.float32).reshape(2, half_c, 1)
    b = bias.astype(jnp.float32).reshape(2, half_c, 1)
    wg = (weight / jnp.sum(weight)).astype(jnp.float32).reshape(2, half_c, 1)

    Cb = _choose_cb(half_c, Cg, HWb, itemsize, budget, N)
    n_cb = half_c // Cb

    # Block-diagonal "same group" broadcast matrix, built once (resident input).
    rows = jnp.arange(Cb, dtype=jnp.int32)
    group_mat = (rows[:, None] // Cg == rows[None, :] // Cg).astype(jnp.float32)

    # VMEM accounting: double-buffered in+out blocks plus elementwise temporaries.
    # TODO(synk): for very large HW even the minimum channel block may not fit;
    # that would require HW tiling with a two-pass stats reduction.
    csize = jnp.dtype(compute_dtype).itemsize
    blk = 2 * Cb * HWb * itemsize                  # one (in or out) block
    temps = 6 * 2 * Cb * HWb * csize               # live elementwise temporaries
    vmem_limit = int(min(max(vmem_limit, 4 * blk + temps + (4 << 20)), vmem_cap))

    kernel = _make_sru_kernel(Cg, HW, n_pad, gate_threshold, compute_dtype)

    elems = N * C * HW
    cost = pl.CostEstimate(
        flops=int(16 * elems + 8 * N * Cb * half_c),
        transcendentals=int(elems),
        bytes_accessed=int(2 * N * 2 * half_c * HWb * itemsize),
    )

    y = pl.pallas_call(
        kernel,
        out_shape=jax.ShapeDtypeStruct((N, 2, half_c, HWb), in_dtype),
        grid_spec=pltpu.PrefetchScalarGridSpec(
            num_scalar_prefetch=0,
            grid=(N, n_cb),
            in_specs=[
                pl.BlockSpec((1, 2, Cb, HWb), lambda n, j: (n, 0, j, 0)),
                pl.BlockSpec((Cb, Cb), lambda n, j: (0, 0)),        # resident group matrix
                pl.BlockSpec((2, Cb, 1), lambda n, j: (0, j, 0)),
                pl.BlockSpec((2, Cb, 1), lambda n, j: (0, j, 0)),
                pl.BlockSpec((2, Cb, 1), lambda n, j: (0, j, 0)),
            ],
            out_specs=pl.BlockSpec((1, 2, Cb, HWb), lambda n, j: (n, 0, j, 0)),
        ),
        compiler_params=pltpu.CompilerParams(
            dimension_semantics=("parallel", "parallel"),
            vmem_limit_bytes=vmem_limit,
        ),
        cost_estimate=cost,
    )(xk, group_mat, w, b, wg)

    if n_pad:
        y = y[..., :HW]
    return y.reshape(N, C, H, W)


def sru_reference(x, weight, bias, group_num=16):
    # Pure-JAX mirror of the PyTorch forward (torch_gn=True path).
    N, C, H, W = x.shape
    xg = x.reshape(N, group_num, -1)
    mean = xg.mean(axis=2, keepdims=True)
    var = xg.var(axis=2, keepdims=True)            # biased, like torch GroupNorm
    xn = ((xg - mean) / jnp.sqrt(var + EPS)).reshape(N, C, H, W)
    gn = xn * weight.reshape(1, C, 1, 1) + bias.reshape(1, C, 1, 1)
    wg = (weight / jnp.sum(weight)).reshape(1, C, 1, 1)
    rew = jax.nn.sigmoid(gn * wg)
    w1 = jnp.where(rew > GATE_THRESHOLD, 1.0, rew)
    w2 = jnp.where(rew > GATE_THRESHOLD, 0.0, rew)
    x1 = w1 * x
    x2 = w2 * x
    x11, x12 = jnp.split(x1, 2, axis=1)
    x21, x22 = jnp.split(x2, 2, axis=1)
    return jnp.concatenate([x11 + x22, x12 + x21], axis=1)


if __name__ == "__main__":
    N, C, H, W = 2, 32, 16, 16
    G = 16

    key = jax.random.PRNGKey(0)
    kx, kw, kb = jax.random.split(key, 3)
    x = jax.random.normal(kx, (N, C, H, W), dtype=jnp.float32)
    # Deterministic synthetic GroupNorm affine parameters (kept positive so
    # sum(weight) stays well away from zero, as the module divides by it).
    weight = 0.5 + jax.random.uniform(kw, (C,), dtype=jnp.float32)
    bias = 0.1 * jax.random.normal(kb, (C,), dtype=jnp.float32)

    y = jax.block_until_ready(sru_forward(x, weight, bias, group_num=G))
    y_ref = sru_reference(x, weight, bias, group_num=G)

    assert y.shape == (N, C, H, W)
    assert jnp.allclose(y, y_ref, rtol=1e-4, atol=1e-5), (
        float(jnp.max(jnp.abs(y - y_ref)))
    )
    print("KERNEL_OK")
</pallas_src>

<mosaic_0001>
module attributes {stable_mosaic.version = 11 : i64} {
  func.func @kernel(%arg0: i32, %arg1: i32, %arg2: memref<1x2x16x256xf32, #tpu.memory_space<vmem>>, %arg3: memref<16x16xf32, #tpu.memory_space<vmem>>, %arg4: memref<2x16x1xf32, #tpu.memory_space<vmem>>, %arg5: memref<2x16x1xf32, #tpu.memory_space<vmem>>, %arg6: memref<2x16x1xf32, #tpu.memory_space<vmem>>, %arg7: memref<1x2x16x256xf32, #tpu.memory_space<vmem>>) attributes {dimension_semantics = [#tpu.dimension_semantics<parallel>, #tpu.dimension_semantics<parallel>], iteration_bounds = array<i64: 2, 1>, scalar_prefetch = 0 : i64, scratch_operands = 0 : i64, tpu.core_type = #tpu.core_type<tc>, window_params = [{transform_indices = @transform_0, window_bounds = array<i64: 1, 2, 16, 256>}, {pipeline_mode = #tpu.pipeline_mode<synchronous>, transform_indices = @transform_1, window_bounds = array<i64: 16, 16>}, {transform_indices = @transform_2, window_bounds = array<i64: 2, 16, 1>}, {transform_indices = @transform_3, window_bounds = array<i64: 2, 16, 1>}, {transform_indices = @transform_4, window_bounds = array<i64: 2, 16, 1>}, {transform_indices = @transform_5, window_bounds = array<i64: 1, 2, 16, 256>}]} {
    %c0 = arith.constant 0 : index
    %c0_0 = arith.constant 0 : index
    %0 = vector.load %arg3[%c0, %c0_0] : memref<16x16xf32, #tpu.memory_space<vmem>>, vector<16x16xf32>
    %c0_1 = arith.constant 0 : index
    %c0_2 = arith.constant 0 : index
    %c0_3 = arith.constant 0 : index
    %c0_4 = arith.constant 0 : index
    %1 = vector.load %arg2[%c0_1, %c0_2, %c0_3, %c0_4] : memref<1x2x16x256xf32, #tpu.memory_space<vmem>>, vector<1x1x16x256xf32>
    %2 = vector.shape_cast %1 : vector<1x1x16x256xf32> to vector<16x256xf32>
    %c0_5 = arith.constant 0 : index
    %c1 = arith.constant 1 : index
    %c0_6 = arith.constant 0 : index
    %c0_7 = arith.constant 0 : index
    %3 = vector.load %arg2[%c0_5, %c1, %c0_6, %c0_7] : memref<1x2x16x256xf32, #tpu.memory_space<vmem>>, vector<1x1x16x256xf32>
    %4 = vector.shape_cast %3 : vector<1x1x16x256xf32> to vector<16x256xf32>
    %cst = arith.constant dense<0.000000e+00> : vector<16xf32>
    %5 = vector.multi_reduction <add>, %2, %cst [1] : vector<16x256xf32> to vector<16xf32>
    %6 = vector.shape_cast %5 : vector<16xf32> to vector<16x1xf32>
    %cst_8 = arith.constant dense<0.000000e+00> : vector<16xf32>
    %7 = vector.multi_reduction <add>, %4, %cst_8 [1] : vector<16x256xf32> to vector<16xf32>
    %8 = vector.shape_cast %7 : vector<16xf32> to vector<16x1xf32>
    %9 = tpu.concatenate %6, %8 in 1 : vector<16x1xf32>, vector<16x1xf32> -> vector<16x2xf32>
    %cst_9 = arith.constant dense<0.000000e+00> : vector<16x2xf32>
    %10 = tpu.matmul %0, %9, %cst_9 {dimension_numbers = #tpu.dot_dimension_numbers<[1], [0], [0], [1], [0, 0, 1, 1], [], []>} : vector<16x16xf32>, vector<16x2xf32>, vector<16x2xf32> -> vector<16x2xf32>
    %cst_10 = arith.constant 0.001953125 : f32
    %11 = vector.broadcast %cst_10 : f32 to vector<16x2xf32>
    %12 = arith.mulf %10, %11 : vector<16x2xf32>
    %13 = vector.extract_strided_slice %12 {offsets = [0, 0], sizes = [16, 1], strides = [1, 1]} : vector<16x2xf32> to vector<16x1xf32>
    %14 = vector.extract_strided_slice %12 {offsets = [0, 1], sizes = [16, 1], strides = [1, 1]} : vector<16x2xf32> to vector<16x1xf32>
    %15 = vector.broadcast %13 : vector<16x1xf32> to vector<16x256xf32>
    %16 = arith.subf %2, %15 : vector<16x256xf32>
    %17 = vector.broadcast %14 : vector<16x1xf32> to vector<16x256xf32>
    %18 = arith.subf %4, %17 : vector<16x256xf32>
    %19 = arith.mulf %16, %16 : vector<16x256xf32>
    %cst_11 = arith.constant dense<0.000000e+00> : vector<16xf32>
    %20 = vector.multi_reduction <add>, %19, %cst_11 [1] : vector<16x256xf32> to vector<16xf32>
    %21 = vector.shape_cast %20 : vector<16xf32> to vector<16x1xf32>
    %22 = arith.mulf %18, %18 : vector<16x256xf32>
    %cst_12 = arith.constant dense<0.000000e+00> : vector<16xf32>
    %23 = vector.multi_reduction <add>, %22, %cst_12 [1] : vector<16x256xf32> to vector<16xf32>
    %24 = vector.shape_cast %23 : vector<16xf32> to vector<16x1xf32>
    %25 = tpu.concatenate %21, %24 in 1 : vector<16x1xf32>, vector<16x1xf32> -> vector<16x2xf32>
    %cst_13 = arith.constant dense<0.000000e+00> : vector<16x2xf32>
    %26 = tpu.matmul %0, %25, %cst_13 {dimension_numbers = #tpu.dot_dimension_numbers<[1], [0], [0], [1], [0, 0, 1, 1], [], []>} : vector<16x16xf32>, vector<16x2xf32>, vector<16x2xf32> -> vector<16x2xf32>
    %cst_14 = arith.constant 0.001953125 : f32
    %27 = vector.broadcast %cst_14 : f32 to vector<16x2xf32>
    %28 = arith.mulf %26, %27 : vector<16x2xf32>
    %cst_15 = arith.constant 9.99999974E-6 : f32
    %29 = vector.broadcast %cst_15 : f32 to vector<16x2xf32>
    %30 = arith.addf %28, %29 : vector<16x2xf32>
    %31 = math.rsqrt %30 : vector<16x2xf32>
    %c0_16 = arith.constant 0 : index
    %c0_17 = arith.constant 0 : index
    %c0_18 = arith.constant 0 : index
    %32 = vector.load %arg4[%c0_16, %c0_17, %c0_18] : memref<2x16x1xf32, #tpu.memory_space<vmem>>, vector<1x16x1xf32>
    %33 = vector.shape_cast %32 : vector<1x16x1xf32> to vector<16x1xf32>
    %c0_19 = arith.constant 0 : index
    %c0_20 = arith.constant 0 : index
    %c0_21 = arith.constant 0 : index
    %34 = vector.load %arg5[%c0_19, %c0_20, %c0_21] : memref<2x16x1xf32, #tpu.memory_space<vmem>>, vector<1x16x1xf32>
    %35 = vector.shape_cast %34 : vector<1x16x1xf32> to vector<16x1xf32>
    %c0_22 = arith.constant 0 : index
    %c0_23 = arith.constant 0 : index
    %c0_24 = arith.constant 0 : index
    %36 = vector.load %arg6[%c0_22, %c0_23, %c0_24] : memref<2x16x1xf32, #tpu.memory_space<vmem>>, vector<1x16x1xf32>
    %37 = vector.shape_cast %36 : vector<1x16x1xf32> to vector<16x1xf32>
    %38 = vector.extract_strided_slice %31 {offsets = [0, 0], sizes = [16, 1], strides = [1, 1]} : vector<16x2xf32> to vector<16x1xf32>
    %39 = arith.mulf %38, %33 : vector<16x1xf32>
    %40 = vector.broadcast %39 : vector<16x1xf32> to vector<16x256xf32>
    %41 = arith.mulf %16, %40 : vector<16x256xf32>
    %42 = vector.broadcast %35 : vector<16x1xf32> to vector<16x256xf32>
    %43 = arith.addf %41, %42 : vector<16x256xf32>
    %44 = vector.broadcast %37 : vector<16x1xf32> to vector<16x256xf32>
    %45 = arith.mulf %43, %44 : vector<16x256xf32>
    %46 = arith.negf %45 : vector<16x256xf32>
    %47 = math.exp %46 : vector<16x256xf32>
    %cst_25 = arith.constant 1.000000e+00 : f32
    %48 = vector.broadcast %cst_25 : f32 to vector<16x256xf32>
    %49 = arith.addf %48, %47 : vector<16x256xf32>
    %50 = arith.divf %48, %49 : vector<16x256xf32>
    %cst_26 = arith.constant 0.000000e+00 : f32
    %51 = vector.broadcast %cst_26 : f32 to vector<16x256xf32>
    %52 = arith.cmpf ogt, %45, %51 : vector<16x256xf32>
    %53 = arith.mulf %50, %2 : vector<16x256xf32>
    %54 = arith.select %52, %2, %53 : vector<16x256xi1>, vector<16x256xf32>
    %cst_27 = arith.constant 0.000000e+00 : f32
    %55 = vector.broadcast %cst_27 : f32 to vector<16x256xf32>
    %56 = arith.select %52, %55, %53 : vector<16x256xi1>, vector<16x256xf32>
    %c1_28 = arith.constant 1 : index
    %c0_29 = arith.constant 0 : index
    %c0_30 = arith.constant 0 : index
    %57 = vector.load %arg4[%c1_28, %c0_29, %c0_30] : memref<2x16x1xf32, #tpu.memory_space<vmem>>, vector<1x16x1xf32>
    %58 = vector.shape_cast %57 : vector<1x16x1xf32> to vector<16x1xf32>
    %c1_31 = arith.constant 1 : index
    %c0_32 = arith.constant 0 : index
    %c0_33 = arith.constant 0 : index
    %59 = vector.load %arg5[%c1_31, %c0_32, %c0_33] : memref<2x16x1xf32, #tpu.memory_space<vmem>>, vector<1x16x1xf32>
    %60 = vector.shape_cast %59 : vector<1x16x1xf32> to vector<16x1xf32>
    %c1_34 = arith.constant 1 : index
    %c0_35 = arith.constant 0 : index
    %c0_36 = arith.constant 0 : index
    %61 = vector.load %arg6[%c1_34, %c0_35, %c0_36] : memref<2x16x1xf32, #tpu.memory_space<vmem>>, vector<1x16x1xf32>
    %62 = vector.shape_cast %61 : vector<1x16x1xf32> to vector<16x1xf32>
    %63 = vector.extract_strided_slice %31 {offsets = [0, 1], sizes = [16, 1], strides = [1, 1]} : vector<16x2xf32> to vector<16x1xf32>
    %64 = arith.mulf %63, %58 : vector<16x1xf32>
    %65 = vector.broadcast %64 : vector<16x1xf32> to vector<16x256xf32>
    %66 = arith.mulf %18, %65 : vector<16x256xf32>
    %67 = vector.broadcast %60 : vector<16x1xf32> to vector<16x256xf32>
    %68 = arith.addf %66, %67 : vector<16x256xf32>
    %69 = vector.broadcast %62 : vector<16x1xf32> to vector<16x256xf32>
    %70 = arith.mulf %68, %69 : vector<16x256xf32>
    %71 = arith.negf %70 : vector<16x256xf32>
    %72 = math.exp %71 : vector<16x256xf32>
    %cst_37 = arith.constant 1.000000e+00 : f32
    %73 = vector.broadcast %cst_37 : f32 to vector<16x256xf32>
    %74 = arith.addf %73, %72 : vector<16x256xf32>
    %75 = arith.divf %73, %74 : vector<16x256xf32>
    %cst_38 = arith.constant 0.000000e+00 : f32
    %76 = vector.broadcast %cst_38 : f32 to vector<16x256xf32>
    %77 = arith.cmpf ogt, %70, %76 : vector<16x256xf32>
    %78 = arith.mulf %75, %4 : vector<16x256xf32>
    %79 = arith.select %77, %4, %78 : vector<16x256xi1>, vector<16x256xf32>
    %cst_39 = arith.constant 0.000000e+00 : f32
    %80 = vector.broadcast %cst_39 : f32 to vector<16x256xf32>
    %81 = arith.select %77, %80, %78 : vector<16x256xi1>, vector<16x256xf32>
    %82 = arith.addf %54, %81 : vector<16x256xf32>
    %c0_40 = arith.constant 0 : index
    %c0_41 = arith.constant 0 : index
    %c0_42 = arith.constant 0 : index
    %c0_43 = arith.constant 0 : index
    %83 = vector.load %arg7[%c0_40, %c0_41, %c0_42, %c0_43] : memref<1x2x16x256xf32, #tpu.memory_space<vmem>>, vector<1x1x16x256xf32>
    %84 = vector.shape_cast %83 : vector<1x1x16x256xf32> to vector<16x256xf32>
    %85 = vector.shape_cast %82 : vector<16x256xf32> to vector<1x1x16x256xf32>
    tpu.vector_store %arg7[%c0_40, %c0_41, %c0_42, %c0_43], %85 {strides = array<i32>} : memref<1x2x16x256xf32, #tpu.memory_space<vmem>>, vector<1x1x16x256xf32>,
    %86 = arith.addf %79, %56 : vector<16x256xf32>
    %c0_44 = arith.constant 0 : index
    %c1_45 = arith.constant 1 : index
    %c0_46 = arith.constant 0 : index
    %c0_47 = arith.constant 0 : index
    %87 = vector.load %arg7[%c0_44, %c1_45, %c0_46, %c0_47] : memref<1x2x16x256xf32, #tpu.memory_space<vmem>>, vector<1x1x16x256xf32>
    %88 = vector.shape_cast %87 : vector<1x1x16x256xf32> to vector<16x256xf32>
    %89 = vector.shape_cast %86 : vector<16x256xf32> to vector<1x1x16x256xf32>
    tpu.vector_store %arg7[%c0_44, %c1_45, %c0_46, %c0_47], %89 {strides = array<i32>} : memref<1x2x16x256xf32, #tpu.memory_space<vmem>>, vector<1x1x16x256xf32>,
    return
  }
  func.func @transform_0(%arg0: i32, %arg1: i32) -> (i32, i32, i32, i32) {
    %c0_i32 = arith.constant 0 : i32
    %c0_i32_0 = arith.constant 0 : i32
    %c0_i32_1 = arith.constant 0 : i32
    return %arg0, %c0_i32, %arg1, %c0_i32_0 : i32, i32, i32, i32
  }
  func.func @transform_1(%arg0: i32, %arg1: i32) -> (i32, i32) {
    %c0_i32 = arith.constant 0 : i32
    %c0_i32_0 = arith.constant 0 : i32
    %c0_i32_1 = arith.constant 0 : i32
    return %c0_i32, %c0_i32_0 : i32, i32
  }
  func.func @transform_2(%arg0: i32, %arg1: i32) -> (i32, i32, i32) {
    %c0_i32 = arith.constant 0 : i32
    %c0_i32_0 = arith.constant 0 : i32
    %c0_i32_1 = arith.constant 0 : i32
    return %c0_i32, %arg1, %c0_i32_0 : i32, i32, i32
  }
  func.func @transform_3(%arg0: i32, %arg1: i32) -> (i32, i32, i32) {
    %c0_i32 = arith.constant 0 : i32
    %c0_i32_0 = arith.constant 0 : i32
    %c0_i32_1 = arith.constant 0 : i32
    return %c0_i32, %arg1, %c0_i32_0 : i32, i32, i32
  }
  func.func @transform_4(%arg0: i32, %arg1: i32) -> (i32, i32, i32) {
    %c0_i32 = arith.constant 0 : i32
    %c0_i32_0 = arith.constant 0 : i32
    %c0_i32_1 = arith.constant 0 : i32
    return %c0_i32, %arg1, %c0_i32_0 : i32, i32, i32
  }
  func.func @transform_5(%arg0: i32, %arg1: i32) -> (i32, i32, i32, i32) {
    %c0_i32 = arith.constant 0 : i32
    %c0_i32_0 = arith.constant 0 : i32
    %c0_i32_1 = arith.constant 0 : i32
    return %arg0, %c0_i32, %arg1, %c0_i32_0 : i32, i32, i32, i32
  }
}

</mosaic_0001>

<llo_original>
// kernel: tpu_custom_call.1
$region0: #{tpu_custom_call.1}
  #allocation0 [shape = 'u32[]', space=smem, size = 0x4, offset = 0x4, fixed_abs, tag = 'smem constant byte address 0x4 - core index']
  #allocation1 [shape = 'u32[144,128]{1,0:T(1,128)}', space=vmem, size = 0x12000, scoped, tag = 'internal scratch']
  %s0 = inlined_call_operand.hbm [shape: f32[2,2,16,256], index: 0, kind: input, shape index: {}]
  %s1 = inlined_call_operand.vmem [shape: f32[16,16], index: 1, kind: input, shape index: {}]
  %s2 = inlined_call_operand.vmem [shape: f32[2,16,1], index: 2, kind: input, shape index: {}]
  %s3 = inlined_call_operand.vmem [shape: f32[2,16,1], index: 3, kind: input, shape index: {}]
  %s4 = inlined_call_operand.vmem [shape: f32[2,16,1], index: 4, kind: input, shape index: {}]
  %s5 = inlined_call_operand.hbm [shape: f32[2,2,16,256], index: 5, kind: output, shape index: {}]
  %s6 = sld [smem:[#allocation0]]
  $region57: #{tpu_custom_call.1} parent=0
    _
  %s8 = ssub.s32 1, %s6
  %s9 = scalar_select 0, %s8, %s6
  $region1: #{tpu_custom_call.1} parent=0
    #allocation2 [shape = 'u8[65536]{0}', space=vmem, size = 0x10000, scoped, tag = 'input window, operand 0']
    #allocation3 [shape = 's32[2]{0}', space=sflag, size = 0x8, scoped, tag = 'scoped memory for tpu_custom_call.1']
    #allocation4 [shape = 's32[2]{0}', space=sflag, size = 0x8, scoped, tag = 'scoped memory for tpu_custom_call.1']
    #allocation5 [shape = 'u8[65536]{0}', space=vmem, size = 0x10000, scoped, tag = 'output window, operand 0']
    %10 = vsyncpa [#allocation3], 0
    %s11 = scalar_lea.sflag [#allocation3], 1
    %12 = vsyncpa %s11, 0
    %13 = vsyncpa [#allocation4], 0
    %s14 = scalar_lea.sflag [#allocation4], 1
    %15 = vsyncpa %s14, 0
    loop: start=0, step=1, limit=4
    $region2: #{tpu_custom_call.1} parent=1 // loop_pre_header
      _
    $region3: #{tpu_custom_call.1} parent=1 // loop_header
      %s17 = sphi 0, %s21
      %p18 = scmp.ge.s32.totalorder %s17, 4
      %s24 = sphi 0, %s36
      %s25 = sphi 0, %s32
      %s26 = sphi 0, %s24
      %s27 = sphi 0, %s25
      %s28 = sphi 0, %s26
      %s29 = sphi 0, %s27
      %s41 = sphi 0, %s43
      %s44 = sphi 0, %s41
      %s45 = sphi 0, %s44
      %s61 = sphi 0, %s45
      %s65 = sphi 0, %s65
      %s67 = sphi 0, %s65
      %s68 = sphi 0, %s67
      %s82 = sphi 0, %s68
      %s88 = sphi 0, %s90
      %s91 = sphi 0, %s88
      %s92 = sphi 0, %s91
      %s108 = sphi 0, %s92
      %s114 = sphi 0, %s116
      %s117 = sphi 0, %s114
      %s118 = sphi 0, %s117
      %s134 = sphi 0, %s118
      %s140 = sphi 0, %s142
      %s143 = sphi 0, %s140
      %s144 = sphi 0, %s143
      %s160 = sphi 0, %s144
      %s168 = sphi 0, %s170
      %s171 = sphi 0, %s168
      %s172 = sphi 0, %s171
      %s188 = sphi 0, %s172
    $region4: #{tpu_custom_call.1} parent=1 // loop_header_branch
      %20 = sbr.rel (%p18) target = $region8
    $region5: #{tpu_custom_call.1} parent=1 // loop_body
      %s22 = ssub.s32 %s17, 1
      %s23 = ssub.s32 %s17, 2
      %s30 = sadd.s32 1, %s25
      %p31 = scmp.ge.s32.totalorder %s30, 1
      %s32 = scalar_select %p31, 0, %s30
      %s33 = sadd.s32 1, %s24
      %s34 = scalar_select %p31, %s33, %s24
      %p35 = scmp.ge.s32.totalorder %s34, 2
      %s36 = scalar_select %p35, 0, %s34
      %s37 = ssub.s32 %s24, %s36
      %s38 = ssub.s32 %s25, %s32
      %s39 = sor.u32 %s37, %s38
      %p40 = scmp.eq.s32.totalorder %s39, 0
      %s42 = sadd.s32 %s41, 1
      %s43 = scalar_select %p40, %s41, %s42
      %p46 = pneg %p40
      %p47 = scmp.eq.s32.totalorder %s17, 1
      %p48 = por %p46, %p47
      %p49 = scmp.ne.s32.totalorder %s41, %s44
      %p50 = scmp.eq.s32.totalorder %s17, 0
      %p51 = por %p49, %p50
      %p52 = scmp.ne.s32.totalorder %s41, %s44
      %p53 = scmp.eq.s32.totalorder %s22, 1
      %p54 = por %p52, %p53
      %p55 = scmp.ne.s32.totalorder %s44, %s45
      %p56 = scmp.eq.s32.totalorder %s22, 0
      %p57 = por %p55, %p56
      %p58 = scmp.ne.s32.totalorder %s44, %s45
      %p59 = scmp.eq.s32.totalorder %s23, 1
      %p60 = por %p58, %p59
      %p62 = scmp.ne.s32.totalorder %s45, %s61
      %p63 = scmp.eq.s32.totalorder %s23, 0
      %p64 = por %p62, %p63
      %s66 = sadd.s32 %s65, 1
      %p69 = scmp.eq.s32.totalorder %s17, 1
      %p70 = scmp.ne.s32.totalorder %s65, %s67
      %p71 = scmp.eq.s32.totalorder %s17, 0
      %p72 = por %p70, %p71
      %p73 = scmp.ne.s32.totalorder %s65, %s67
      %p74 = scmp.eq.s32.totalorder %s22, 1
      %p75 = por %p73, %p74
      %p76 = scmp.ne.s32.totalorder %s67, %s68
      %p77 = scmp.eq.s32.totalorder %s22, 0
      %p78 = por %p76, %p77
      %p79 = scmp.ne.s32.totalorder %s67, %s68
      %p80 = scmp.eq.s32.totalorder %s23, 1
      %p81 = por %p79, %p80
      %p83 = scmp.ne.s32.totalorder %s68, %s82
      %p84 = scmp.eq.s32.totalorder %s23, 0
      %p85 = por %p83, %p84
      %s86 = ssub.s32 %s25, %s32
      %p87 = scmp.eq.s32.totalorder %s86, 0
      %s89 = sadd.s32 %s88, 1
      %s90 = scalar_select %p87, %s88, %s89
      %p93 = pneg %p87
      %p94 = scmp.eq.s32.totalorder %s17, 1
      %p95 = por %p93, %p94
      %p96 = scmp.ne.s32.totalorder %s88, %s91
      %p97 = scmp.eq.s32.totalorder %s17, 0
      %p98 = por %p96, %p97
      %p99 = scmp.ne.s32.totalorder %s88, %s91
      %p100 = scmp.eq.s32.totalorder %s22, 1
      %p101 = por %p99, %p100
      %p102 = scmp.ne.s32.totalorder %s91, %s92
      %p103 = scmp.eq.s32.totalorder %s22, 0
      %p104 = por %p102, %p103
      %p105 = scmp.ne.s32.totalorder %s91, %s92
      %p106 = scmp.eq.s32.totalorder %s23, 1
      %p107 = por %p105, %p106
      %p109 = scmp.ne.s32.totalorder %s92, %s108
      %p110 = scmp.eq.s32.totalorder %s23, 0
      %p111 = por %p109, %p110
      %s112 = ssub.s32 %s25, %s32
      %p113 = scmp.eq.s32.totalorder %s112, 0
      %s115 = sadd.s32 %s114, 1
      %s116 = scalar_select %p113, %s114, %s115
      %p119 = pneg %p113
      %p120 = scmp.eq.s32.totalorder %s17, 1
      %p121 = por %p119, %p120
      %p122 = scmp.ne.s32.totalorder %s114, %s117
      %p123 = scmp.eq.s32.totalorder %s17, 0
      %p124 = por %p122, %p123
      %p125 = scmp.ne.s32.totalorder %s114, %s117
      %p126 = scmp.eq.s32.totalorder %s22, 1
      %p127 = por %p125, %p126
      %p128 = scmp.ne.s32.totalorder %s117, %s118
      %p129 = scmp.eq.s32.totalorder %s22, 0
      %p130 = por %p128, %p129
      %p131 = scmp.ne.s32.totalorder %s117, %s118
      %p132 = scmp.eq.s32.totalorder %s23, 1
      %p133 = por %p131, %p132
      %p135 = scmp.ne.s32.totalorder %s118, %s134
      %p136 = scmp.eq.s32.totalorder %s23, 0
      %p137 = por %p135, %p136
      %s138 = ssub.s32 %s25, %s32
      %p139 = scmp.eq.s32.totalorder %s138, 0
      %s141 = sadd.s32 %s140, 1
      %s142 = scalar_select %p139, %s140, %s141
      %p145 = pneg %p139
      %p146 = scmp.eq.s32.totalorder %s17, 1
      %p147 = por %p145, %p146
      %p148 = scmp.ne.s32.totalorder %s140, %s143
      %p149 = scmp.eq.s32.totalorder %s17, 0
      %p150 = por %p148, %p149
      %p151 = scmp.ne.s32.totalorder %s140, %s143
      %p152 = scmp.eq.s32.totalorder %s22, 1
      %p153 = por %p151, %p152
      %p154 = scmp.ne.s32.totalorder %s143, %s144
      %p155 = scmp.eq.s32.totalorder %s22, 0
      %p156 = por %p154, %p155
      %p157 = scmp.ne.s32.totalorder %s143, %s144
      %p158 = scmp.eq.s32.totalorder %s23, 1
      %p159 = por %p157, %p158
      %p161 = scmp.ne.s32.totalorder %s144, %s160
      %p162 = scmp.eq.s32.totalorder %s23, 0
      %p163 = por %p161, %p162
      %s164 = ssub.s32 %s24, %s36
      %s165 = ssub.s32 %s25, %s32
      %s166 = sor.u32 %s164, %s165
      %p167 = scmp.eq.s32.totalorder %s166, 0
      %s169 = sadd.s32 %s168, 1
      %s170 = scalar_select %p167, %s168, %s169
      %p173 = pneg %p167
      %p174 = scmp.eq.s32.totalorder %s17, 1
      %p175 = por %p173, %p174
      %p176 = scmp.ne.s32.totalorder %s168, %s171
      %p177 = scmp.eq.s32.totalorder %s17, 0
      %p178 = por %p176, %p177
      %p179 = scmp.ne.s32.totalorder %s168, %s171
      %p180 = scmp.eq.s32.totalorder %s22, 1
      %p181 = por %p179, %p180
      %p182 = scmp.ne.s32.totalorder %s171, %s172
      %p183 = scmp.eq.s32.totalorder %s22, 0
      %p184 = por %p182, %p183
      %p185 = scmp.ne.s32.totalorder %s171, %s172
      %p186 = scmp.eq.s32.totalorder %s23, 1
      %p187 = por %p185, %p186
      %p189 = scmp.ne.s32.totalorder %s172, %s188
      %p190 = scmp.eq.s32.totalorder %s23, 0
      %p191 = por %p189, %p190
      %p192 = scmp.le.s32.totalorder 1, %s17
      %p193 = scmp.lt.s32.totalorder %s17, 3
      %p194 = pnand %p192, %p193
      %p195 = pneg %p194
      // Predicated region
      $region9: #{tpu_custom_call.1} parent=5 // pred_check
        _
      $region10: #{tpu_custom_call.1} parent=5 // pred_check_branch
        %197 = sbr.rel (%p194) target = $region12
      $region11: #{tpu_custom_call.1} parent=5 // pred_region
        %s198 = ssub.s32 %s17, 1
        // Predicated region
        $region13: #{tpu_custom_call.1} parent=11 // pred_check
          %p199 = pneg %p78
        $region14: #{tpu_custom_call.1} parent=11 // pred_check_branch
          %201 = sbr.rel (%p199) target = $region16
        $region15: #{tpu_custom_call.1} parent=11 // pred_region
          _
        $region16: #{tpu_custom_call.1} parent=11 // pred_fallthru
          _
        // Predicated region
        $region17: #{tpu_custom_call.1} parent=11 // pred_check
          %p202 = pneg %p104
        $region18: #{tpu_custom_call.1} parent=11 // pred_check_branch
          %204 = sbr.rel (%p202) target = $region20
        $region19: #{tpu_custom_call.1} parent=11 // pred_region
          %s205 = smul.u32 2, %s27
          %p206 = scmp.lt.s32.totalorder %s205, 1
          %s207 = scalar_select %p206, %s205, 1
          %s208 = smul.addr %s207, 8
          %s209 = scalar_lea.vmem %s2, %s208
          %s210 = smul.u32 2, %s27
        $region20: #{tpu_custom_call.1} parent=11 // pred_fallthru
          _
        // Predicated region
        $region21: #{tpu_custom_call.1} parent=11 // pred_check
          %p211 = pneg %p130
        $region22: #{tpu_custom_call.1} parent=11 // pred_check_branch
          %213 = sbr.rel (%p211) target = $region24
        $region23: #{tpu_custom_call.1} parent=11 // pred_region
          %s214 = smul.u32 2, %s27
          %p215 = scmp.lt.s32.totalorder %s214, 1
          %s216 = scalar_select %p215, %s214, 1
          %s217 = smul.addr %s216, 8
          %s218 = scalar_lea.vmem %s3, %s217
          %s219 = smul.u32 2, %s27
        $region24: #{tpu_custom_call.1} parent=11 // pred_fallthru
          _
        // Predicated region
        $region25: #{tpu_custom_call.1} parent=11 // pred_check
          %p220 = pneg %p156
        $region26: #{tpu_custom_call.1} parent=11 // pred_check_branch
          %222 = sbr.rel (%p220) target = $region28
        $region27: #{tpu_custom_call.1} parent=11 // pred_region
          %s223 = smul.u32 2, %s27
          %p224 = scmp.lt.s32.totalorder %s223, 1
          %s225 = scalar_select %p224, %s223, 1
          %s226 = smul.addr %s225, 8
          %s227 = scalar_lea.vmem %s4, %s226
          %s228 = smul.u32 2, %s27
        $region28: #{tpu_custom_call.1} parent=11 // pred_fallthru
          _
      $region12: #{tpu_custom_call.1} parent=5 // pred_fallthru
        _
      %p229 = scmp.lt.s32.totalorder %s17, 2
      // Predicated region
      $region29: #{tpu_custom_call.1} parent=5 // pred_check
        %p230 = pneg %p229
      $region30: #{tpu_custom_call.1} parent=5 // pred_check_branch
        %232 = sbr.rel (%p230) target = $region32
      $region31: #{tpu_custom_call.1} parent=5 // pred_region
        // Predicated region
        $region33: #{tpu_custom_call.1} parent=31 // pred_check
          %p233 = pneg %p51
        $region34: #{tpu_custom_call.1} parent=31 // pred_check_branch
          %235 = sbr.rel (%p233) target = $region36
        $region35: #{tpu_custom_call.1} parent=31 // pred_region
          %s236 = sand.u32 %s41, 1
          %s237 = scalar_lea.sflag [#allocation3], %s236
          %s238 = sand.u32 %s41, 1
          %s239 = smul.addr %s238, 64
          %s240 = scalar_lea.vmem [#allocation2], %s239
          %s241 = smul.u32 2, %s25
          %s243 = ssub.s32 1024, 1024
          %244 = vsyncadd %s237, %s243
          %s245 = smul.addr %s241, 2
          %s246 = smul.addr %s24, 8
          %s247 = sadd.s32 %s245, %s246
          %s248 = smul.addr %s247, 128
          %s249 = scalar_lea.hbm %s0, %s248
          %s250 = sshll.u32 %s240, 4
          %s251 = int_to_ptr.vmem [resolvable:$true] %s250
          %256 = dma.hbm_to_vmem [thread:$0]  %s249, 1024, %s251, %s237, 256, 256, 16
        $region36: #{tpu_custom_call.1} parent=31 // pred_fallthru
          _
      $region32: #{tpu_custom_call.1} parent=5 // pred_fallthru
        _
      %p257 = scmp.le.s32.totalorder 1, %s17
      %p258 = scmp.lt.s32.totalorder %s17, 3
      %p259 = pnand %p257, %p258
      %p260 = pneg %p259
      // Predicated region
      $region37: #{tpu_custom_call.1} parent=5 // pred_check
        _
      $region38: #{tpu_custom_call.1} parent=5 // pred_check_branch
        %262 = sbr.rel (%p259) target = $region40
      $region39: #{tpu_custom_call.1} parent=5 // pred_region
        %s263 = ssub.s32 %s17, 1
        %s264 = sand.u32 %s44, 1
        %s265 = scalar_lea.sflag [#allocation3], %s264
        %s266 = sand.u32 %s44, 1
        %s267 = smul.addr %s266, 64
        %s268 = scalar_lea.vmem [#allocation2], %s267
        // Predicated region
        $region41: #{tpu_custom_call.1} parent=39 // pred_check
          %p269 = pneg %p57
        $region42: #{tpu_custom_call.1} parent=39 // pred_check_branch
          %271 = sbr.rel (%p269) target = $region44
        $region43: #{tpu_custom_call.1} parent=39 // pred_region
          %272 = dma.done %s265, 1024
        $region44: #{tpu_custom_call.1} parent=39 // pred_fallthru
          _
        %s273 = sand.u32 %s44, 1
        %s274 = scalar_lea.sflag [#allocation3], %s273
        %s275 = sand.u32 %s44, 1
        %s276 = smul.addr %s275, 64
        %s277 = scalar_lea.vmem [#allocation2], %s276
        %p278 = pneg %p57
        %p279 = pneg %p54
        %p280 = pneg %p78
        %p281 = pneg %p75
        %s282 = smul.u32 2, %s27
        %p283 = scmp.lt.s32.totalorder %s282, 1
        %s284 = scalar_select %p283, %s282, 1
        %s285 = smul.addr %s284, 8
        %s286 = scalar_lea.vmem %s2, %s285
        %p287 = pneg %p104
        %p288 = pneg %p101
        %s289 = smul.u32 2, %s27
        %p290 = scmp.lt.s32.totalorder %s289, 1
        %s291 = scalar_select %p290, %s289, 1
        %s292 = smul.addr %s291, 8
        %s293 = scalar_lea.vmem %s3, %s292
        %p294 = pneg %p130
        %p295 = pneg %p127
        %s296 = smul.u32 2, %s27
        %p297 = scmp.lt.s32.totalorder %s296, 1
        %s298 = scalar_select %p297, %s296, 1
        %s299 = smul.addr %s298, 8
        %s300 = scalar_lea.vmem %s4, %s299
        %p301 = pneg %p156
        %p302 = pneg %p153
        %p303 = pneg %p184
        %p304 = pneg %p181
        %s305 = sand.u32 %s171, 1
        %s306 = scalar_lea.sflag [#allocation4], %s305
        %s307 = sand.u32 %s171, 1
        %s308 = smul.addr %s307, 64
        %s309 = scalar_lea.vmem [#allocation5], %s308
        %s310 = smul.u32 2, %s27
        %s311 = smul.u32 2, %s27
        %p312 = scmp.lt.s32.totalorder %s311, 1
        %s313 = scalar_select %p312, %s311, 1
        %s314 = smul.addr %s313, 8
        %s315 = scalar_lea.vmem %s2, %s314
        %s316 = smul.u32 2, %s27
        %s317 = smul.u32 2, %s27
        %p318 = scmp.lt.s32.totalorder %s317, 1
        %s319 = scalar_select %p318, %s317, 1
        %s320 = smul.addr %s319, 8
        %s321 = scalar_lea.vmem %s3, %s320
        %s322 = smul.u32 2, %s27
        %s323 = smul.u32 2, %s27
        %p324 = scmp.lt.s32.totalorder %s323, 1
        %s325 = scalar_select %p324, %s323, 1
        %s326 = smul.addr %s325, 8
        %s327 = scalar_lea.vmem %s4, %s326
        %s328 = smul.u32 2, %s27
        %s329 = smul.u32 2, %s27
        %v330 = vld [vmem:[%s1] sm:$0xff]
        %v331 = vld [vmem:[%s1 + $0x8] sm:$0xff]
        %v332 = vld [vmem:[%s268] sm:$0xff]
        %v333 = vld [vmem:[%s268 + $0x8] sm:$0xff]
        %v334 = vld [vmem:[%s268 + $0x10] sm:$0xff]
        %v335 = vld [vmem:[%s268 + $0x18] sm:$0xff]
        %s336 = scalar_lea.vmem %s268, 32 [#allocation2]
        %v337 = vld [vmem:[%s336] sm:$0xff]
        %v338 = vld [vmem:[%s336 + $0x8] sm:$0xff]
        %v339 = vld [vmem:[%s336 + $0x10] sm:$0xff]
        %v340 = vld [vmem:[%s336 + $0x18] sm:$0xff]
        %v341 = vadd.f32 %v332, %v333
        %342 = vadd.xlane.f32.xlu0 %v341
        %v343 = vpop.xlane.xlu0 %342
        %v344 = vadd.f32 %v334, %v335
        %345 = vadd.xlane.f32.xlu0 %v344
        %v346 = vpop.xlane.xlu0 %345
        %v347 = vadd.f32 %v337, %v338
        %348 = vadd.xlane.f32.xlu0 %v347
        %v349 = vpop.xlane.xlu0 %348
        %v350 = vadd.f32 %v339, %v340
        %351 = vadd.xlane.f32.xlu0 %v350
        %v352 = vpop.xlane.xlu0 %351
        %vm353 = vcmask 7168
        %v354 = vsel %vm353, %v343, %v349
        %v355 = vsel %vm353, %v346, %v352
        %vm356 = vcmask 130048
        %v358 = vsel %vm356, %v330, 0
        %v361 = vsel %vm356, %v331, 0
        %363 = vmatprep.subr.mxu0 0.0
        %364 = vmatpush1.msra.mxu0 %v354
        %365 = vmatprep.subr.mxu0 0.0
        %366 = vmatpush1.msra.mxu0 %v355
        %367 = vmatprep.subr.mxu0 0.0
        %368 = vmatpush1.msra.mxu0 0.0
        %369 = vmatprep.subr.mxu0 0.0
        %370 = vmatpush1.msra.mxu0 0.0
        %371 = vmatprep.subr.mxu0 0.0
        %372 = vmatpush1.msra.mxu0 0.0
        %373 = vmatprep.subr.mxu0 0.0
        %374 = vmatpush1.msra.mxu0 0.0
        %375 = vmatprep.subr.mxu0 0.0
        %376 = vmatpush1.msra.mxu0 0.0
        %377 = vmatprep.subr.mxu0 0.0
        %378 = vmatpush1.msra.mxu0 0.0
        %379 = vmatprep.subr.mxu0 0.0
        %380 = vmatpush1.msra.mxu0 0.0
        %381 = vmatprep.subr.mxu0 0.0
        %382 = vmatpush1.msra.mxu0 0.0
        %383 = vmatprep.subr.mxu0 0.0
        %384 = vmatpush1.msra.mxu0 0.0
        %385 = vmatprep.subr.mxu0 0.0
        %386 = vmatpush1.msra.mxu0 0.0
        %387 = vmatprep.subr.mxu0 0.0
        %388 = vmatpush1.msra.mxu0 0.0
        %389 = vmatprep.subr.mxu0 0.0
        %390 = vmatpush1.msra.mxu0 0.0
        %391 = vmatprep.subr.mxu0 0.0
        %392 = vmatpush1.msra.mxu0 0.0
        %393 = vmatprep.subr.mxu0 0.0
        %394 = vmatpush1.msra.mxu0 0.0
        %395 = vmatprep.subr.mxu0 0.0
        %396 = vmatpush1.msra.mxu0 0.0
        %397 = vmatprep.subr.mxu0 0.0
        %398 = vmatpush1.msra.mxu0 0.0
        %399 = vmatprep.subr.mxu0 0.0
        %400 = vmatpush1.msra.mxu0 0.0
        %401 = vmatprep.subr.mxu0 0.0
        %402 = vmatpush1.msra.mxu0 0.0
        %403 = vmatprep.subr.mxu0 0.0
        %404 = vmatpush1.msra.mxu0 0.0
        %405 = vmatprep.subr.mxu0 0.0
        %406 = vmatpush1.msra.mxu0 0.0
        %407 = vmatprep.subr.mxu0 0.0
        %408 = vmatpush1.msra.mxu0 0.0
        %409 = vmatprep.subr.mxu0 0.0
        %410 = vmatpush1.msra.mxu0 0.0
        %411 = vmatprep.subr.mxu0 0.0
        %412 = vmatpush1.msra.mxu0 0.0
        %413 = vmatprep.subr.mxu0 0.0
        %414 = vmatpush1.msra.mxu0 0.0
        %415 = vmatprep.subr.mxu0 0.0
        %416 = vmatpush1.msra.mxu0 0.0
        %417 = vmatprep.subr.mxu0 0.0
        %418 = vmatpush1.msra.mxu0 0.0
        %419 = vmatprep.subr.mxu0 0.0
        %420 = vmatpush1.msra.mxu0 0.0
        %421 = vmatprep.subr.mxu0 0.0
        %422 = vmatpush1.msra.mxu0 0.0
        %423 = vmatprep.subr.mxu0 0.0
        %424 = vmatpush1.msra.mxu0 0.0
        %425 = vmatprep.subr.mxu0 0.0
        %426 = vmatpush1.msra.mxu0 0.0
        %427 = vmatprep.mubr.f32.mxu0 0.0
        %428 = vmatmul.mubr.f32.gmra.mrb[0].mxu0 %v358
        %v429 = vpop.f32.mrb[0].mxu0
        %v430 = vadd.f32 0.0, %v429
        %v431 = vpop.f32.mrb[0].mxu0
        %432 = vmatprep.mubr.f32.mxu0 0.0
        %433 = vmatmul.mubr.f32.gmra.mrb[0].mxu0 %v361
        %v434 = vpop.f32.mrb[0].mxu0
        %v435 = vadd.f32 0.0, %v434
        %v436 = vpop.f32.mrb[0].mxu0
        %437 = vdwg.mxu0
        %v438 = vmul.f32 %v430, 0.001953125
        %v439 = vmul.f32 %v435, 0.001953125
        %441 = vset.pattern.permute.xlu0 0
        %442 = vperm.xlu0 %441, %v438
        %v443 = vpop.permute.xlu0 %442
        %446 = vset.pattern.permute.xlu0 0
        %447 = vperm.xlu0 %446, %v439
        %v448 = vpop.permute.xlu0 %447
        %v450 = vsub.f32 %v332, %v443
        %v451 = vsub.f32 %v333, %v443
        %v452 = vsub.f32 %v334, %v448
        %v453 = vsub.f32 %v335, %v448
        %454 = vset.pattern.permute.xlu0 1
        %455 = vperm.xlu0 %454, %v438
        %v456 = vpop.permute.xlu0 %455
        %458 = vset.pattern.permute.xlu0 1
        %459 = vperm.xlu0 %458, %v439
        %v460 = vpop.permute.xlu0 %459
        %v462 = vsub.f32 %v337, %v456
        %v463 = vsub.f32 %v338, %v456
        %v464 = vsub.f32 %v339, %v460
        %v465 = vsub.f32 %v340, %v460
        %v466 = vmul.f32 %v450, %v450
        %v467 = vmul.f32 %v451, %v451
        %v468 = vmul.f32 %v452, %v452
        %v469 = vmul.f32 %v453, %v453
        %v470 = vadd.f32 %v466, %v467
        %471 = vadd.xlane.f32.xlu0 %v470
        %v472 = vpop.xlane.xlu0 %471
        %v473 = vadd.f32 %v468, %v469
        %474 = vadd.xlane.f32.xlu0 %v473
        %v475 = vpop.xlane.xlu0 %474
        %v476 = vmul.f32 %v462, %v462
        %v477 = vmul.f32 %v463, %v463
        %v478 = vmul.f32 %v464, %v464
        %v479 = vmul.f32 %v465, %v465
        %v480 = vadd.f32 %v476, %v477
        %481 = vadd.xlane.f32.xlu0 %v480
        %v482 = vpop.xlane.xlu0 %481
        %v483 = vadd.f32 %v478, %v479
        %484 = vadd.xlane.f32.xlu0 %v483
        %v485 = vpop.xlane.xlu0 %484
        %v486 = vsel %vm353, %v472, %v482
        %v487 = vsel %vm353, %v475, %v485
        %488 = vmatprep.subr.mxu0 0.0
        %489 = vmatpush1.msra.mxu0 %v486
        %490 = vmatprep.subr.mxu0 0.0
        %491 = vmatpush1.msra.mxu0 %v487
        %492 = vmatprep.subr.mxu0 0.0
        %493 = vmatpush1.msra.mxu0 0.0
        %494 = vmatprep.subr.mxu0 0.0
        %495 = vmatpush1.msra.mxu0 0.0
        %496 = vmatprep.subr.mxu0 0.0
        %497 = vmatpush1.msra.mxu0 0.0
        %498 = vmatprep.subr.mxu0 0.0
        %499 = vmatpush1.msra.mxu0 0.0
        %500 = vmatprep.subr.mxu0 0.0
        %501 = vmatpush1.msra.mxu0 0.0
        %502 = vmatprep.subr.mxu0 0.0
        %503 = vmatpush1.msra.mxu0 0.0
        %504 = vmatprep.subr.mxu0 0.0
        %505 = vmatpush1.msra.mxu0 0.0
        %506 = vmatprep.subr.mxu0 0.0
        %507 = vmatpush1.msra.mxu0 0.0
        %508 = vmatprep.subr.mxu0 0.0
        %509 = vmatpush1.msra.mxu0 0.0
        %510 = vmatprep.subr.mxu0 0.0
        %511 = vmatpush1.msra.mxu0 0.0
        %512 = vmatprep.subr.mxu0 0.0
        %513 = vmatpush1.msra.mxu0 0.0
        %514 = vmatprep.subr.mxu0 0.0
        %515 = vmatpush1.msra.mxu0 0.0
        %516 = vmatprep.subr.mxu0 0.0
        %517 = vmatpush1.msra.mxu0 0.0
        %518 = vmatprep.subr.mxu0 0.0
        %519 = vmatpush1.msra.mxu0 0.0
        %520 = vmatprep.subr.mxu0 0.0
        %521 = vmatpush1.msra.mxu0 0.0
        %522 = vmatprep.subr.mxu0 0.0
        %523 = vmatpush1.msra.mxu0 0.0
        %524 = vmatprep.subr.mxu0 0.0
        %525 = vmatpush1.msra.mxu0 0.0
        %526 = vmatprep.subr.mxu0 0.0
        %527 = vmatpush1.msra.mxu0 0.0
        %528 = vmatprep.subr.mxu0 0.0
        %529 = vmatpush1.msra.mxu0 0.0
        %530 = vmatprep.subr.mxu0 0.0
        %531 = vmatpush1.msra.mxu0 0.0
        %532 = vmatprep.subr.mxu0 0.0
        %533 = vmatpush1.msra.mxu0 0.0
        %534 = vmatprep.subr.mxu0 0.0
        %535 = vmatpush1.msra.mxu0 0.0
        %536 = vmatprep.subr.mxu0 0.0
        %537 = vmatpush1.msra.mxu0 0.0
        %538 = vmatprep.subr.mxu0 0.0
        %539 = vmatpush1.msra.mxu0 0.0
        %540 = vmatprep.subr.mxu0 0.0
        %541 = vmatpush1.msra.mxu0 0.0
        %542 = vmatprep.subr.mxu0 0.0
        %543 = vmatpush1.msra.mxu0 0.0
        %544 = vmatprep.subr.mxu0 0.0
        %545 = vmatpush1.msra.mxu0 0.0
        %546 = vmatprep.subr.mxu0 0.0
        %547 = vmatpush1.msra.mxu0 0.0
        %548 = vmatprep.subr.mxu0 0.0
        %549 = vmatpush1.msra.mxu0 0.0
        %550 = vmatprep.subr.mxu0 0.0
        %551 = vmatpush1.msra.mxu0 0.0
        %552 = vmatprep.mubr.f32.mxu0 0.0
        %553 = vmatmul.mubr.f32.gmra.mrb[0].mxu0 %v358
        %v554 = vpop.f32.mrb[0].mxu0
        %v555 = vadd.f32 0.0, %v554
        %v556 = vpop.f32.mrb[0].mxu0
        %557 = vmatprep.mubr.f32.mxu0 0.0
        %558 = vmatmul.mubr.f32.gmra.mrb[0].mxu0 %v361
        %v559 = vpop.f32.mrb[0].mxu0
        %v560 = vadd.f32 0.0, %v559
        %v561 = vpop.f32.mrb[0].mxu0
        %562 = vdwg.mxu0
        %v563 = vmul.f32 %v555, 0.001953125
        %v564 = vmul.f32 %v560, 0.001953125
        %v565 = vadd.f32 %v563, 1e-05
        %v566 = vadd.f32 %v564, 1e-05
        %v567 = vrsqrt.pop %v565
        %v568 = vrsqrt.pop %v566
        %v569 = vld [vmem:[%s315] sm:$0xff]
        %v570 = vld [vmem:[%s315 + $0x8] sm:$0xff]
        %v571 = vld [vmem:[%s321] sm:$0xff]
        %v572 = vld [vmem:[%s321 + $0x8] sm:$0xff]
        %v573 = vld [vmem:[%s327] sm:$0xff]
        %v574 = vld [vmem:[%s327 + $0x8] sm:$0xff]
        %v575 = vmul.f32 %v567, %v569
        %v576 = vmul.f32 %v568, %v570
        %578 = vset.pattern.permute.xlu0 0
        %579 = vperm.xlu0 %578, %v575
        %v580 = vpop.permute.xlu0 %579
        %583 = vset.pattern.permute.xlu0 0
        %584 = vperm.xlu0 %583, %v576
        %v585 = vpop.permute.xlu0 %584
        %v587 = vmul.f32 %v450, %v580
        %v588 = vmul.f32 %v451, %v580
        %v589 = vmul.f32 %v452, %v585
        %v590 = vmul.f32 %v453, %v585
        %592 = vset.pattern.permute.xlu0 0
        %593 = vperm.xlu0 %592, %v571
        %v594 = vpop.permute.xlu0 %593
        %597 = vset.pattern.permute.xlu0 0
        %598 = vperm.xlu0 %597, %v572
        %v599 = vpop.permute.xlu0 %598
        %v601 = vadd.f32 %v587, %v594
        %v602 = vadd.f32 %v588, %v594
        %v603 = vadd.f32 %v589, %v599
        %v604 = vadd.f32 %v590, %v599
        %606 = vset.pattern.permute.xlu0 0
        %607 = vperm.xlu0 %606, %v573
        %v608 = vpop.permute.xlu0 %607
        %611 = vset.pattern.permute.xlu0 0
        %612 = vperm.xlu0 %611, %v574
        %v613 = vpop.permute.xlu0 %612
        %v615 = vmul.f32 %v601, %v608
        %v616 = vmul.f32 %v602, %v608
        %v617 = vmul.f32 %v603, %v613
        %v618 = vmul.f32 %v604, %v613
        %v619 = vxor.u32 %v615, 2147483648
        %v620 = vxor.u32 %v616, 2147483648
        %v621 = vxor.u32 %v617, 2147483648
        %v622 = vxor.u32 %v618, 2147483648
        %v623 = vmul.f32 %v619, 1.442695
        %v624 = vpow.pop %v623
        %v625 = vmul.f32 %v620, 1.442695
        %v626 = vpow.pop %v625
        %v627 = vmul.f32 %v621, 1.442695
        %v628 = vpow.pop %v627
        %v629 = vmul.f32 %v622, 1.442695
        %v630 = vpow.pop %v629
        %v631 = vadd.f32 %v624, 1.0
        %v632 = vadd.f32 %v626, 1.0
        %v633 = vadd.f32 %v628, 1.0
        %v634 = vadd.f32 %v630, 1.0
        %v635 = vrcp.pop %v631
        %v636 = vmul.f32 1.0, %v635
        %v637 = vrcp.pop %v632
        %v638 = vmul.f32 1.0, %v637
        %v639 = vrcp.pop %v633
        %v640 = vmul.f32 1.0, %v639
        %v641 = vrcp.pop %v634
        %v642 = vmul.f32 1.0, %v641
        %vm643 = vcmp.gt.f32.partialorder %v615, 0.0
        %vm644 = vcmp.gt.f32.partialorder %v616, 0.0
        %vm645 = vcmp.gt.f32.partialorder %v617, 0.0
        %vm646 = vcmp.gt.f32.partialorder %v618, 0.0
        %v647 = vmul.f32 %v636, %v332
        %v648 = vmul.f32 %v638, %v333
        %v649 = vmul.f32 %v640, %v334
        %v650 = vmul.f32 %v642, %v335
        %v651 = vsel %vm643, %v332, %v647
        %v652 = vsel %vm644, %v333, %v648
        %v653 = vsel %vm645, %v334, %v649
        %v654 = vsel %vm646, %v335, %v650
        %v655 = vsel %vm643, 0.0, %v647
        %v656 = vsel %vm644, 0.0, %v648
        %v657 = vsel %vm645, 0.0, %v649
        %v658 = vsel %vm646, 0.0, %v650
        %s659 = scalar_lea.vmem %s315, 16
        %v660 = vld [vmem:[%s659] sm:$0xff]
        %v661 = vld [vmem:[%s659 + $0x8] sm:$0xff]
        %s662 = scalar_lea.vmem %s321, 16
        %v663 = vld [vmem:[%s662] sm:$0xff]
        %v664 = vld [vmem:[%s662 + $0x8] sm:$0xff]
        %s665 = scalar_lea.vmem %s327, 16
        %v666 = vld [vmem:[%s665] sm:$0xff]
        %v667 = vld [vmem:[%s665 + $0x8] sm:$0xff]
        %670 = vrot.lane.b32.xlu0 %v660, 1
        %v671 = vpop.permute.xlu0 %670
        %672 = vrot.lane.b32.xlu0 %v661, 1
        %v673 = vpop.permute.xlu0 %672
        %v676 = vmul.f32 %v567, %v671
        %v677 = vmul.f32 %v568, %v673
        %679 = vset.pattern.permute.xlu0 1
        %680 = vperm.xlu0 %679, %v676
        %v681 = vpop.permute.xlu0 %680
        %684 = vset.pattern.permute.xlu0 1
        %685 = vperm.xlu0 %684, %v677
        %v686 = vpop.permute.xlu0 %685
        %v688 = vmul.f32 %v462, %v681
        %v689 = vmul.f32 %v463, %v681
        %v690 = vmul.f32 %v464, %v686
        %v691 = vmul.f32 %v465, %v686
        %693 = vset.pattern.permute.xlu0 0
        %694 = vperm.xlu0 %693, %v663
        %v695 = vpop.permute.xlu0 %694
        %698 = vset.pattern.permute.xlu0 0
        %699 = vperm.xlu0 %698, %v664
        %v700 = vpop.permute.xlu0 %699
        %v702 = vadd.f32 %v688, %v695
        %v703 = vadd.f32 %v689, %v695
        %v704 = vadd.f32 %v690, %v700
        %v705 = vadd.f32 %v691, %v700
        %707 = vset.pattern.permute.xlu0 0
        %708 = vperm.xlu0 %707, %v666
        %v709 = vpop.permute.xlu0 %708
        %712 = vset.pattern.permute.xlu0 0
        %713 = vperm.xlu0 %712, %v667
        %v714 = vpop.permute.xlu0 %713
        %v716 = vmul.f32 %v702, %v709
        %v717 = vmul.f32 %v703, %v709
        %v718 = vmul.f32 %v704, %v714
        %v719 = vmul.f32 %v705, %v714
        %v720 = vxor.u32 %v716, 2147483648
        %v721 = vxor.u32 %v717, 2147483648
        %v722 = vxor.u32 %v718, 2147483648
        %v723 = vxor.u32 %v719, 2147483648
        %v724 = vmul.f32 %v720, 1.442695
        %v725 = vpow.pop %v724
        %v726 = vmul.f32 %v721, 1.442695
        %v727 = vpow.pop %v726
        %v728 = vmul.f32 %v722, 1.442695
        %v729 = vpow.pop %v728
        %v730 = vmul.f32 %v723, 1.442695
        %v731 = vpow.pop %v730
        %v732 = vadd.f32 %v725, 1.0
        %v733 = vadd.f32 %v727, 1.0
        %v734 = vadd.f32 %v729, 1.0
        %v735 = vadd.f32 %v731, 1.0
        %v736 = vrcp.pop %v732
        %v737 = vmul.f32 1.0, %v736
        %v738 = vrcp.pop %v733
        %v739 = vmul.f32 1.0, %v738
        %v740 = vrcp.pop %v734
        %v741 = vmul.f32 1.0, %v740
        %v742 = vrcp.pop %v735
        %v743 = vmul.f32 1.0, %v742
        %vm744 = vcmp.gt.f32.partialorder %v716, 0.0
        %vm745 = vcmp.gt.f32.partialorder %v717, 0.0
        %vm746 = vcmp.gt.f32.partialorder %v718, 0.0
        %vm747 = vcmp.gt.f32.partialorder %v719, 0.0
        %v748 = vmul.f32 %v737, %v337
        %v749 = vmul.f32 %v739, %v338
        %v750 = vmul.f32 %v741, %v339
        %v751 = vmul.f32 %v743, %v340
        %v752 = vsel %vm744, %v337, %v748
        %v753 = vsel %vm745, %v338, %v749
        %v754 = vsel %vm746, %v339, %v750
        %v755 = vsel %vm747, %v340, %v751
        %v756 = vsel %vm744, 0.0, %v748
        %v757 = vsel %vm745, 0.0, %v749
        %v758 = vsel %vm746, 0.0, %v750
        %v759 = vsel %vm747, 0.0, %v751
        %v760 = vadd.f32 %v651, %v756
        %v761 = vadd.f32 %v652, %v757
        %v762 = vadd.f32 %v653, %v758
        %v763 = vadd.f32 %v654, %v759
        %764 = vst [vmem:[%s309] sm:$0xff] %v760
        %765 = vst [vmem:[%s309 + $0x8] sm:$0xff] %v761
        %766 = vst [vmem:[%s309 + $0x10] sm:$0xff] %v762
        %767 = vst [vmem:[%s309 + $0x18] sm:$0xff] %v763
        %v768 = vadd.f32 %v752, %v655
        %v769 = vadd.f32 %v753, %v656
        %v770 = vadd.f32 %v754, %v657
        %v771 = vadd.f32 %v755, %v658
        %s772 = scalar_lea.vmem %s309, 32 [#allocation5]
        %773 = vst [vmem:[%s772] sm:$0xff] %v768
        %774 = vst [vmem:[%s772 + $0x8] sm:$0xff] %v769
        %775 = vst [vmem:[%s772 + $0x10] sm:$0xff] %v770
        %776 = vst [vmem:[%s772 + $0x18] sm:$0xff] %v771
        %s777 = sand.u32 %s171, 1
        %s778 = scalar_lea.sflag [#allocation4], %s777
        %s779 = sand.u32 %s171, 1
        %s780 = smul.addr %s779, 64
        %s781 = scalar_lea.vmem [#allocation5], %s780
        // Predicated region
        $region45: #{tpu_custom_call.1} parent=39 // pred_check
          %p782 = pneg %p181
        $region46: #{tpu_custom_call.1} parent=39 // pred_check_branch
          %784 = sbr.rel (%p782) target = $region48
        $region47: #{tpu_custom_call.1} parent=39 // pred_region
          %s785 = smul.u32 2, %s27
          %s787 = ssub.s32 1024, 1024
          %788 = vsyncadd %s778, %s787
          %s789 = smul.addr %s785, 2
          %s790 = smul.addr %s26, 8
          %s791 = sadd.s32 %s789, %s790
          %s792 = smul.addr %s791, 128
          %s793 = scalar_lea.hbm %s5, %s792
          %s794 = sshll.u32 %s781, 4
          %s795 = int_to_ptr.vmem [resolvable:$true] %s794
          %800 = dma.vmem_to_hbm [thread:$0]  %s795, 1024, %s793, %s778, 256, 256, 16
        $region48: #{tpu_custom_call.1} parent=39 // pred_fallthru
          _
      $region40: #{tpu_custom_call.1} parent=5 // pred_fallthru
        _
      %p801 = scmp.le.s32.totalorder 2, %s17
      // Predicated region
      $region49: #{tpu_custom_call.1} parent=5 // pred_check
        %p802 = pneg %p801
      $region50: #{tpu_custom_call.1} parent=5 // pred_check_branch
        %804 = sbr.rel (%p802) target = $region52
      $region51: #{tpu_custom_call.1} parent=5 // pred_region
        %s805 = ssub.s32 %s17, 2
        // Predicated region
        $region53: #{tpu_custom_call.1} parent=51 // pred_check
          %p806 = pneg %p187
        $region54: #{tpu_custom_call.1} parent=51 // pred_check_branch
          %808 = sbr.rel (%p806) target = $region56
        $region55: #{tpu_custom_call.1} parent=51 // pred_region
          %s809 = sand.u32 %s172, 1
          %s810 = scalar_lea.sflag [#allocation4], %s809
          %s811 = sand.u32 %s172, 1
          %s812 = smul.addr %s811, 64
          %s813 = scalar_lea.vmem [#allocation5], %s812
          %814 = dma.done %s810, 1024
        $region56: #{tpu_custom_call.1} parent=51 // pred_fallthru
          _
      $region52: #{tpu_custom_call.1} parent=5 // pred_fallthru
        _
    $region6: #{tpu_custom_call.1} parent=1 // loop_footer
      %s21 = sadd.s32 1, %s17
    $region7: #{tpu_custom_call.1} parent=1 // loop_footer_branch
      %16 = sbr.rel target = $region3
    $region8: #{tpu_custom_call.1} parent=1 // loop_exit
      _
    %815 = vsyncpa [#allocation3], 1
    %s816 = scalar_lea.sflag [#allocation3], 1
    %817 = vsyncpa %s816, 1
    %818 = vsyncpa [#allocation4], 1
    %s819 = scalar_lea.sflag [#allocation4], 1
    %820 = vsyncpa %s819, 1

</llo_original>
